<compile_context>
chip_gen: v6e
topology: v6e:2x2x1
jax: 0.10.0
libtpu: 0.0.40
codegen_flags: <defaults>
</compile_context>

<pallas_src>
import jax
import jax.numpy as jnp
from jax.experimental import pallas as pl
from jax.experimental.pallas import tpu as pltpu

IN_DIM = 20          # real input features
IN_PAD = 24          # input features padded to a sublane multiple (zeros)
H1, H2, OUT_DIM = 64, 32, 16
LANE = 128           # all layer outputs padded to 128 lanes inside the kernel
W1_ROWS = IN_PAD     # 24
W2_OFF = W1_ROWS             # 24
W3_OFF = W2_OFF + LANE       # 152   (W2 padded to 128 rows)
W_ROWS = W3_OFF + LANE       # 280   (W3 padded to 128 rows)
DEFAULT_TILE_B = 256


def nest_mlp_kernel(x_ref, w_ref, b_ref, o_ref):
    # x_ref: (TILE_B, 24)   w_ref: (280, 128) packed [W1;W2;W3]   b_ref: (8, 128) rows 0..2 = b1..b3
    x = x_ref[...]
    w1 = w_ref[0:W2_OFF, :]            # (24, 128)  cols >= 64 are zero
    w2 = w_ref[W2_OFF:W3_OFF, :]       # (128, 128) rows >= 64 / cols >= 32 are zero
    w3 = w_ref[W3_OFF:W_ROWS, :]       # (128, 128) rows >= 32 / cols >= 16 are zero
    b1 = b_ref[0:1, :]
    b2 = b_ref[1:2, :]
    b3 = b_ref[2:3, :]

    h1 = jnp.maximum(jnp.dot(x, w1, preferred_element_type=jnp.float32) + b1, 0.0)
    h2 = jnp.maximum(jnp.dot(h1, w2, preferred_element_type=jnp.float32) + b2, 0.0)
    y = jnp.dot(h2, w3, preferred_element_type=jnp.float32) + b3
    o_ref[...] = y.astype(o_ref.dtype)   # full 128-lane (unmasked) store; padded lanes are zero


def _round_up(n, m):
    return ((n + m - 1) // m) * m


def pack_params(w1, b1, w2, b2, w3, b3):
    """Pack the 3 (in,out) weights / biases into one lane-aligned weight and one bias buffer."""
    wp = jnp.zeros((W_ROWS, LANE), jnp.float32)
    wp = wp.at[0:IN_DIM, 0:H1].set(w1)
    wp = wp.at[W2_OFF:W2_OFF + H1, 0:H2].set(w2)
    wp = wp.at[W3_OFF:W3_OFF + H2, 0:OUT_DIM].set(w3)
    bp = jnp.zeros((8, LANE), jnp.float32)
    bp = bp.at[0, 0:H1].set(b1.reshape(-1))
    bp = bp.at[1, 0:H2].set(b2.reshape(-1))
    bp = bp.at[2, 0:OUT_DIM].set(b3.reshape(-1))
    return wp, bp


def nest_mlp(x, w_packed, b_packed, *, tile_b=DEFAULT_TILE_B):
    B = x.shape[0]
    tb = min(tile_b, _round_up(B, 8))          # sublane-aligned tile, modest for small batches
    b_pad = _round_up(B, tb)
    x_pad = jnp.zeros((b_pad, IN_PAD), x.dtype).at[:B, :IN_DIM].set(x)

    out = pl.pallas_call(
        nest_mlp_kernel,
        out_shape=jax.ShapeDtypeStruct((b_pad, LANE), x.dtype),
        grid=(pl.cdiv(b_pad, tb),),
        in_specs=[
            pl.BlockSpec((tb, IN_PAD), lambda i: (i, 0)),          # streamed x tile
            pl.BlockSpec((W_ROWS, LANE), lambda i: (0, 0)),        # packed weights, VMEM-resident
            pl.BlockSpec((8, LANE), lambda i: (0, 0)),             # packed biases, VMEM-resident
        ],
        out_specs=pl.BlockSpec((tb, LANE), lambda i: (i, 0)),      # lane-dense (128-wide) output
        compiler_params=pltpu.CompilerParams(dimension_semantics=("parallel",)),
    )(x_pad, w_packed, b_packed)
    return out[:B, :OUT_DIM]


def init_params(key):
    # Deterministic synthetic init mimicking PyTorch Linear's uniform(-1/sqrt(in), 1/sqrt(in)).
    def linear_init(k, fan_in, fan_out):
        kw, kb = jax.random.split(k)
        bound = 1.0 / jnp.sqrt(fan_in)
        w = jax.random.uniform(kw, (fan_in, fan_out), jnp.float32, -bound, bound)
        b = jax.random.uniform(kb, (1, fan_out), jnp.float32, -bound, bound)
        return w, b

    k1, k2, k3 = jax.random.split(key, 3)
    w1, b1 = linear_init(k1, IN_DIM, H1)
    w2, b2 = linear_init(k2, H1, H2)
    w3, b3 = linear_init(k3, H2, OUT_DIM)
    return w1, b1, w2, b2, w3, b3


def reference(x, w1, b1, w2, b2, w3, b3):
    h1 = jnp.maximum(x @ w1 + b1, 0.0)
    h2 = jnp.maximum(h1 @ w2 + b2, 0.0)
    return h2 @ w3 + b3


if __name__ == "__main__":
    key = jax.random.PRNGKey(0)
    kx, kp = jax.random.split(key)
    params = init_params(kp)
    w_packed, b_packed = pack_params(*params)

    # Small, spec-consistent shapes: batch=2, in_features=20.
    x = jax.random.normal(kx, (2, IN_DIM), jnp.float32)
    out = jax.block_until_ready(nest_mlp(x, w_packed, b_packed))
    ref = reference(x, *params)
    assert out.shape == (2, OUT_DIM)
    assert jnp.allclose(out, ref, atol=1e-5, rtol=1e-5)

    # Larger batch to exercise the batch-tiled grid (two 256-row tiles).
    x_big = jax.random.normal(kx, (512, IN_DIM), jnp.float32)
    out_big = jax.block_until_ready(nest_mlp(x_big, w_packed, b_packed))
    ref_big = reference(x_big, *params)
    assert out_big.shape == (512, OUT_DIM)
    assert jnp.allclose(out_big, ref_big, atol=1e-4, rtol=1e-4)

    print("KERNEL_OK")
</pallas_src>

<mosaic_0001>
module attributes {stable_mosaic.version = 11 : i64} {
  func.func @nest_mlp_kernel(%arg0: i32, %arg1: memref<8x24xf32, #tpu.memory_space<vmem>>, %arg2: memref<280x128xf32, #tpu.memory_space<vmem>>, %arg3: memref<8x128xf32, #tpu.memory_space<vmem>>, %arg4: memref<8x128xf32, #tpu.memory_space<vmem>>) attributes {dimension_semantics = [#tpu.dimension_semantics<parallel>], iteration_bounds = array<i64: 1>, scalar_prefetch = 0 : i64, scratch_operands = 0 : i64, tpu.core_type = #tpu.core_type<tc>, window_params = [{transform_indices = @transform_0, window_bounds = array<i64: 8, 24>}, {pipeline_mode = #tpu.pipeline_mode<synchronous>, transform_indices = @transform_1, window_bounds = array<i64: 280, 128>}, {pipeline_mode = #tpu.pipeline_mode<synchronous>, transform_indices = @transform_2, window_bounds = array<i64: 8, 128>}, {transform_indices = @transform_3, window_bounds = array<i64: 8, 128>}]} {
    %c0 = arith.constant 0 : index
    %c0_0 = arith.constant 0 : index
    %0 = vector.load %arg1[%c0, %c0_0] : memref<8x24xf32, #tpu.memory_space<vmem>>, vector<8x24xf32>
    %c0_1 = arith.constant 0 : index
    %c0_2 = arith.constant 0 : index
    %1 = vector.load %arg2[%c0_1, %c0_2] : memref<280x128xf32, #tpu.memory_space<vmem>>, vector<24x128xf32>
    %c24 = arith.constant 24 : index
    %c0_3 = arith.constant 0 : index
    %2 = vector.load %arg2[%c24, %c0_3] : memref<280x128xf32, #tpu.memory_space<vmem>>, vector<128x128xf32>
    %c152 = arith.constant 152 : index
    %c0_4 = arith.constant 0 : index
    %3 = vector.load %arg2[%c152, %c0_4] : memref<280x128xf32, #tpu.memory_space<vmem>>, vector<128x128xf32>
    %c0_5 = arith.constant 0 : index
    %c0_6 = arith.constant 0 : index
    %4 = vector.load %arg3[%c0_5, %c0_6] : memref<8x128xf32, #tpu.memory_space<vmem>>, vector<1x128xf32>
    %c1 = arith.constant 1 : index
    %c0_7 = arith.constant 0 : index
    %5 = vector.load %arg3[%c1, %c0_7] : memref<8x128xf32, #tpu.memory_space<vmem>>, vector<1x128xf32>
    %c2 = arith.constant 2 : index
    %c0_8 = arith.constant 0 : index
    %6 = vector.load %arg3[%c2, %c0_8] : memref<8x128xf32, #tpu.memory_space<vmem>>, vector<1x128xf32>
    %cst = arith.constant dense<0.000000e+00> : vector<8x128xf32>
    %7 = tpu.matmul %0, %1, %cst {dimension_numbers = #tpu.dot_dimension_numbers<[1], [0], [0], [1], [0, 0, 1, 1], [], []>} : vector<8x24xf32>, vector<24x128xf32>, vector<8x128xf32> -> vector<8x128xf32>
    %8 = vector.broadcast %4 : vector<1x128xf32> to vector<8x128xf32>
    %9 = arith.addf %7, %8 : vector<8x128xf32>
    %cst_9 = arith.constant 0.000000e+00 : f32
    %10 = vector.broadcast %cst_9 : f32 to vector<8x128xf32>
    %11 = arith.maximumf %9, %10 : vector<8x128xf32>
    %cst_10 = arith.constant dense<0.000000e+00> : vector<8x128xf32>
    %12 = tpu.matmul %11, %2, %cst_10 {dimension_numbers = #tpu.dot_dimension_numbers<[1], [0], [0], [1], [0, 0, 1, 1], [], []>} : vector<8x128xf32>, vector<128x128xf32>, vector<8x128xf32> -> vector<8x128xf32>
    %13 = vector.broadcast %5 : vector<1x128xf32> to vector<8x128xf32>
    %14 = arith.addf %12, %13 : vector<8x128xf32>
    %cst_11 = arith.constant 0.000000e+00 : f32
    %15 = vector.broadcast %cst_11 : f32 to vector<8x128xf32>
    %16 = arith.maximumf %14, %15 : vector<8x128xf32>
    %cst_12 = arith.constant dense<0.000000e+00> : vector<8x128xf32>
    %17 = tpu.matmul %16, %3, %cst_12 {dimension_numbers = #tpu.dot_dimension_numbers<[1], [0], [0], [1], [0, 0, 1, 1], [], []>} : vector<8x128xf32>, vector<128x128xf32>, vector<8x128xf32> -> vector<8x128xf32>
    %18 = vector.broadcast %6 : vector<1x128xf32> to vector<8x128xf32>
    %19 = arith.addf %17, %18 : vector<8x128xf32>
    %c0_13 = arith.constant 0 : index
    %c0_14 = arith.constant 0 : index
    %20 = vector.load %arg4[%c0_13, %c0_14] : memref<8x128xf32, #tpu.memory_space<vmem>>, vector<8x128xf32>
    tpu.vector_store %arg4[%c0_13, %c0_14], %19 {strides = array<i32>} : memref<8x128xf32, #tpu.memory_space<vmem>>, vector<8x128xf32>,
    return
  }
  func.func @transform_0(%arg0: i32) -> (i32, i32) {
    %c0_i32 = arith.constant 0 : i32
    %c0_i32_0 = arith.constant 0 : i32
    return %arg0, %c0_i32 : i32, i32
  }
  func.func @transform_1(%arg0: i32) -> (i32, i32) {
    %c0_i32 = arith.constant 0 : i32
    %c0_i32_0 = arith.constant 0 : i32
    %c0_i32_1 = arith.constant 0 : i32
    return %c0_i32, %c0_i32_0 : i32, i32
  }
  func.func @transform_2(%arg0: i32) -> (i32, i32) {
    %c0_i32 = arith.constant 0 : i32
    %c0_i32_0 = arith.constant 0 : i32
    %c0_i32_1 = arith.constant 0 : i32
    return %c0_i32, %c0_i32_0 : i32, i32
  }
  func.func @transform_3(%arg0: i32) -> (i32, i32) {
    %c0_i32 = arith.constant 0 : i32
    %c0_i32_0 = arith.constant 0 : i32
    return %arg0, %c0_i32 : i32, i32
  }
}

</mosaic_0001>

<llo_original>
// kernel: tpu_custom_call.1
$region0: #{tpu_custom_call.1}
  #allocation0 [shape = 'u32[]', space=smem, size = 0x4, offset = 0x4, fixed_abs, tag = 'smem constant byte address 0x4 - core index']
  #allocation1 [shape = 'u32[144,128]{1,0:T(1,128)}', space=vmem, size = 0x12000, scoped, tag = 'internal scratch']
  %s0 = inlined_call_operand.hbm [shape: f32[8,24], index: 0, kind: input, shape index: {}]
  %s1 = inlined_call_operand.hbm [shape: f32[280,128], index: 1, kind: input, shape index: {}]
  %s2 = inlined_call_operand.hbm [shape: f32[8,128], index: 2, kind: input, shape index: {}]
  %s3 = inlined_call_operand.hbm [shape: f32[8,128], index: 3, kind: output, shape index: {}]
  %s4 = sld [smem:[#allocation0]]
  $region34: #{tpu_custom_call.1} parent=0
    _
  %s6 = ssub.s32 1, %s4
  %s7 = scalar_select 0, %s6, %s4
  $region1: #{tpu_custom_call.1} parent=0
    #allocation2 [shape = 'u8[4096]{0}', space=vmem, size = 0x1000, scoped, tag = 'input window, operand 0, single buffered']
    #allocation3 [shape = 's32[1]{0}', space=sflag, size = 0x4, scoped, tag = 'scoped memory for tpu_custom_call.1']
    #allocation4 [shape = 's32[1]{0}', space=sflag, size = 0x4, scoped, tag = 'scoped memory for tpu_custom_call.1']
    #allocation5 [shape = 'u8[143360]{0}', space=vmem, size = 0x23000, scoped, tag = 'input window, operand 1, single buffered']
    #allocation6 [shape = 's32[1]{0}', space=sflag, size = 0x4, scoped, tag = 'scoped memory for tpu_custom_call.1']
    #allocation7 [shape = 'u8[4096]{0}', space=vmem, size = 0x1000, scoped, tag = 'input window, operand 2, single buffered']
    #allocation8 [shape = 'u8[4096]{0}', space=vmem, size = 0x1000, scoped, tag = 'output window, operand 0, single buffered']
    %8 = vsyncpa [#allocation3], 0
    %9 = vsyncpa [#allocation6], 0
    %10 = vsyncpa [#allocation4], 0
    // Predicated region
    $region2: #{tpu_custom_call.1} parent=1 // pred_check
      _
    $region3: #{tpu_custom_call.1} parent=1 // pred_check_branch
      %12 = sbr.rel (0) target = $region5
    $region4: #{tpu_custom_call.1} parent=1 // pred_region
      %s14 = ssub.s32 128, 128
      %15 = vsyncadd [#allocation3], %s14
      %s17 = sshll.u32 [#allocation2], 4
      %s18 = int_to_ptr.vmem [resolvable:$true] %s17
      %20 = dma.hbm_to_vmem [thread:$0]  %s0, 128, %s18, [#allocation3]
    $region5: #{tpu_custom_call.1} parent=1 // pred_fallthru
      _
    // Predicated region
    $region6: #{tpu_custom_call.1} parent=1 // pred_check
      _
    $region7: #{tpu_custom_call.1} parent=1 // pred_check_branch
      %22 = sbr.rel (0) target = $region9
    $region8: #{tpu_custom_call.1} parent=1 // pred_region
      %s24 = ssub.s32 4480, 4480
      %25 = vsyncadd [#allocation6], %s24
      %s26 = sshll.u32 [#allocation5], 4
      %s27 = int_to_ptr.vmem [resolvable:$true] %s26
      %32 = dma.hbm_to_vmem [thread:$0]  %s1, 4480, %s27, [#allocation6], 128, 128, 8
    $region9: #{tpu_custom_call.1} parent=1 // pred_fallthru
      _
    // Predicated region
    $region10: #{tpu_custom_call.1} parent=1 // pred_check
      _
    $region11: #{tpu_custom_call.1} parent=1 // pred_check_branch
      %34 = sbr.rel (0) target = $region13
    $region12: #{tpu_custom_call.1} parent=1 // pred_region
      %s36 = ssub.s32 128, 128
      %37 = vsyncadd [#allocation6], %s36
      %s39 = sshll.u32 [#allocation7], 4
      %s40 = int_to_ptr.vmem [resolvable:$true] %s39
      %42 = dma.hbm_to_vmem [thread:$0]  %s2, 128, %s40, [#allocation6]
    $region13: #{tpu_custom_call.1} parent=1 // pred_fallthru
      _
    // Predicated region
    $region14: #{tpu_custom_call.1} parent=1 // pred_check
      _
    $region15: #{tpu_custom_call.1} parent=1 // pred_check_branch
      %44 = sbr.rel (0) target = $region17
    $region16: #{tpu_custom_call.1} parent=1 // pred_region
      %45 = dma.done [#allocation3], 128
    $region17: #{tpu_custom_call.1} parent=1 // pred_fallthru
      _
    // Predicated region
    $region18: #{tpu_custom_call.1} parent=1 // pred_check
      _
    $region19: #{tpu_custom_call.1} parent=1 // pred_check_branch
      %47 = sbr.rel (0) target = $region21
    $region20: #{tpu_custom_call.1} parent=1 // pred_region
      %48 = dma.done [#allocation6], 4480
    $region21: #{tpu_custom_call.1} parent=1 // pred_fallthru
      _
    // Predicated region
    $region22: #{tpu_custom_call.1} parent=1 // pred_check
      _
    $region23: #{tpu_custom_call.1} parent=1 // pred_check_branch
      %50 = sbr.rel (0) target = $region25
    $region24: #{tpu_custom_call.1} parent=1 // pred_region
      %51 = dma.done [#allocation6], 128
    $region25: #{tpu_custom_call.1} parent=1 // pred_fallthru
      _
    %v52 = vld [vmem:[#allocation2] sm:$0xff]
    %v53 = vld [vmem:[#allocation5] sm:$0xff]
    %v54 = vld [vmem:[#allocation5 + $0x8] sm:$0xff]
    %v55 = vld [vmem:[#allocation5 + $0x10] sm:$0xff]
    %v56 = vld [vmem:[#allocation5 + $0x18] sm:$0xff]
    %v57 = vld [vmem:[#allocation5 + $0x20] sm:$0xff]
    %v58 = vld [vmem:[#allocation5 + $0x28] sm:$0xff]
    %v59 = vld [vmem:[#allocation5 + $0x30] sm:$0xff]
    %v60 = vld [vmem:[#allocation5 + $0x38] sm:$0xff]
    %v61 = vld [vmem:[#allocation5 + $0x40] sm:$0xff]
    %v62 = vld [vmem:[#allocation5 + $0x48] sm:$0xff]
    %v63 = vld [vmem:[#allocation5 + $0x50] sm:$0xff]
    %v64 = vld [vmem:[#allocation5 + $0x58] sm:$0xff]
    %v65 = vld [vmem:[#allocation5 + $0x60] sm:$0xff]
    %v66 = vld [vmem:[#allocation5 + $0x68] sm:$0xff]
    %v67 = vld [vmem:[#allocation5 + $0x70] sm:$0xff]
    %v68 = vld [vmem:[#allocation5 + $0x78] sm:$0xff]
    %v69 = vld [vmem:[#allocation5 + $0x80] sm:$0xff]
    %v70 = vld [vmem:[#allocation5 + $0x88] sm:$0xff]
    %v71 = vld [vmem:[#allocation5 + $0x90] sm:$0xff]
    %v72 = vld [vmem:[#allocation5 + $0x98] sm:$0xff]
    %v73 = vld [vmem:[#allocation5 + $0xa0] sm:$0xff]
    %v74 = vld [vmem:[#allocation5 + $0xa8] sm:$0xff]
    %v75 = vld [vmem:[#allocation5 + $0xb0] sm:$0xff]
    %v76 = vld [vmem:[#allocation5 + $0xb8] sm:$0xff]
    %v77 = vld [vmem:[#allocation5 + $0xc0] sm:$0xff]
    %v78 = vld [vmem:[#allocation5 + $0xc8] sm:$0xff]
    %v79 = vld [vmem:[#allocation5 + $0xd0] sm:$0xff]
    %v80 = vld [vmem:[#allocation5 + $0xd8] sm:$0xff]
    %v81 = vld [vmem:[#allocation5 + $0xe0] sm:$0xff]
    %v82 = vld [vmem:[#allocation5 + $0xe8] sm:$0xff]
    %v83 = vld [vmem:[#allocation5 + $0xf0] sm:$0xff]
    %v84 = vld [vmem:[#allocation5 + $0xf8] sm:$0xff]
    %v85 = vld [vmem:[#allocation5 + $0x100] sm:$0xff]
    %v86 = vld [vmem:[#allocation5 + $0x108] sm:$0xff]
    %v87 = vld [vmem:[#allocation5 + $0x110] sm:$0xff]
    %v88 = vld [vmem:[#allocation7] sm:$0x1]
    %v89 = vld [vmem:[#allocation7 + $0x1] sm:$0x1]
    %v90 = vld [vmem:[#allocation7 + $0x2] sm:$0x1]
    %v91 = vlaneseq
    %v92 = vshrl.u32 %v91, 7
    %v93 = vsub.s32 0, %v92
    %v94 = vrot.slane %v88, %v93
    %vm95 = vcmask 195584
    %v97 = vsel %vm95, %v52, 0
    %99 = vmatprep.subr.mxu0 0.0
    %100 = vmatpush1.msra.mxu0 0.0
    %101 = vmatprep.subr.mxu0 0.0
    %102 = vmatpush1.msra.mxu0 0.0
    %103 = vmatprep.subr.mxu0 0.0
    %104 = vmatpush1.msra.mxu0 0.0
    %105 = vmatprep.subr.mxu0 0.0
    %106 = vmatpush1.msra.mxu0 0.0
    %107 = vmatprep.subr.mxu0 0.0
    %108 = vmatpush1.msra.mxu0 0.0
    %109 = vmatprep.subr.mxu0 0.0
    %110 = vmatpush1.msra.mxu0 0.0
    %111 = vmatprep.subr.mxu0 0.0
    %112 = vmatpush1.msra.mxu0 0.0
    %113 = vmatprep.subr.mxu0 0.0
    %114 = vmatpush1.msra.mxu0 0.0
    %115 = vmatprep.subr.mxu0 0.0
    %116 = vmatpush1.msra.mxu0 0.0
    %117 = vmatprep.subr.mxu0 0.0
    %118 = vmatpush1.msra.mxu0 0.0
    %119 = vmatprep.subr.mxu0 0.0
    %120 = vmatpush1.msra.mxu0 0.0
    %121 = vmatprep.subr.mxu0 0.0
    %122 = vmatpush1.msra.mxu0 0.0
    %123 = vmatprep.subr.mxu0 0.0
    %124 = vmatpush1.msra.mxu0 0.0
    %125 = vmatprep.subr.mxu0 0.0
    %126 = vmatpush1.msra.mxu0 %v55
    %127 = vmatprep.subr.mxu0 0.0
    %128 = vmatpush1.msra.mxu0 %v54
    %129 = vmatprep.subr.mxu0 0.0
    %130 = vmatpush1.msra.mxu0 %v53
    %131 = vmatprep.subr.mxu0 0.0
    %132 = vmatpush2.msra.mxu0 0.0
    %133 = vmatprep.subr.mxu0 0.0
    %134 = vmatpush2.msra.mxu0 0.0
    %135 = vmatprep.subr.mxu0 0.0
    %136 = vmatpush2.msra.mxu0 0.0
    %137 = vmatprep.subr.mxu0 0.0
    %138 = vmatpush2.msra.mxu0 0.0
    %139 = vmatprep.subr.mxu0 0.0
    %140 = vmatpush2.msra.mxu0 0.0
    %141 = vmatprep.subr.mxu0 0.0
    %142 = vmatpush2.msra.mxu0 0.0
    %143 = vmatprep.subr.mxu0 0.0
    %144 = vmatpush2.msra.mxu0 0.0
    %145 = vmatprep.subr.mxu0 0.0
    %146 = vmatpush2.msra.mxu0 0.0
    %147 = vmatprep.subr.mxu0 0.0
    %148 = vmatpush2.msra.mxu0 0.0
    %149 = vmatprep.subr.mxu0 0.0
    %150 = vmatpush2.msra.mxu0 0.0
    %151 = vmatprep.subr.mxu0 0.0
    %152 = vmatpush2.msra.mxu0 0.0
    %153 = vmatprep.subr.mxu0 0.0
    %154 = vmatpush2.msra.mxu0 0.0
    %155 = vmatprep.subr.mxu0 0.0
    %156 = vmatpush2.msra.mxu0 0.0
    %157 = vmatprep.subr.mxu0 0.0
    %158 = vmatpush2.msra.mxu0 0.0
    %159 = vmatprep.subr.mxu0 0.0
    %160 = vmatpush2.msra.mxu0 0.0
    %161 = vmatprep.subr.mxu0 0.0
    %162 = vmatpush2.msra.mxu0 0.0
    %163 = vmatprep.mubr.f32.mxu0 0.0
    %164 = vmatmul.mubr.f32.gmra.mxu0 %v97
    %v165 = vpop.f32.mrf.mxu0
    %v166 = vadd.f32 %v94, %v165
    %v167 = vpop.f32.mrf.mxu0
    %168 = vdwg.mxu0
    %v169 = vmax.f32 %v166, 0.0
    %v170 = vlaneseq
    %v171 = vshrl.u32 %v170, 7
    %v172 = vsub.s32 0, %v171
    %v173 = vrot.slane %v89, %v172
    %174 = vmatprep.subr.mxu0 0.0
    %175 = vmatpush1.msra.mxu0 %v71
    %176 = vmatprep.subr.mxu0 0.0
    %177 = vmatpush1.msra.mxu0 %v70
    %178 = vmatprep.subr.mxu0 0.0
    %179 = vmatpush1.msra.mxu0 %v69
    %180 = vmatprep.subr.mxu0 0.0
    %181 = vmatpush1.msra.mxu0 %v68
    %182 = vmatprep.subr.mxu0 0.0
    %183 = vmatpush1.msra.mxu0 %v67
    %184 = vmatprep.subr.mxu0 0.0
    %185 = vmatpush1.msra.mxu0 %v66
    %186 = vmatprep.subr.mxu0 0.0
    %187 = vmatpush1.msra.mxu0 %v65
    %188 = vmatprep.subr.mxu0 0.0
    %189 = vmatpush1.msra.mxu0 %v64
    %190 = vmatprep.subr.mxu0 0.0
    %191 = vmatpush1.msra.mxu0 %v63
    %192 = vmatprep.subr.mxu0 0.0
    %193 = vmatpush1.msra.mxu0 %v62
    %194 = vmatprep.subr.mxu0 0.0
    %195 = vmatpush1.msra.mxu0 %v61
    %196 = vmatprep.subr.mxu0 0.0
    %197 = vmatpush1.msra.mxu0 %v60
    %198 = vmatprep.subr.mxu0 0.0
    %199 = vmatpush1.msra.mxu0 %v59
    %200 = vmatprep.subr.mxu0 0.0
    %201 = vmatpush1.msra.mxu0 %v58
    %202 = vmatprep.subr.mxu0 0.0
    %203 = vmatpush1.msra.mxu0 %v57
    %204 = vmatprep.subr.mxu0 0.0
    %205 = vmatpush1.msra.mxu0 %v56
    %206 = vmatprep.subr.mxu0 0.0
    %207 = vmatpush2.msra.mxu0 0.0
    %208 = vmatprep.subr.mxu0 0.0
    %209 = vmatpush2.msra.mxu0 0.0
    %210 = vmatprep.subr.mxu0 0.0
    %211 = vmatpush2.msra.mxu0 0.0
    %212 = vmatprep.subr.mxu0 0.0
    %213 = vmatpush2.msra.mxu0 0.0
    %214 = vmatprep.subr.mxu0 0.0
    %215 = vmatpush2.msra.mxu0 0.0
    %216 = vmatprep.subr.mxu0 0.0
    %217 = vmatpush2.msra.mxu0 0.0
    %218 = vmatprep.subr.mxu0 0.0
    %219 = vmatpush2.msra.mxu0 0.0
    %220 = vmatprep.subr.mxu0 0.0
    %221 = vmatpush2.msra.mxu0 0.0
    %222 = vmatprep.subr.mxu0 0.0
    %223 = vmatpush2.msra.mxu0 0.0
    %224 = vmatprep.subr.mxu0 0.0
    %225 = vmatpush2.msra.mxu0 0.0
    %226 = vmatprep.subr.mxu0 0.0
    %227 = vmatpush2.msra.mxu0 0.0
    %228 = vmatprep.subr.mxu0 0.0
    %229 = vmatpush2.msra.mxu0 0.0
    %230 = vmatprep.subr.mxu0 0.0
    %231 = vmatpush2.msra.mxu0 0.0
    %232 = vmatprep.subr.mxu0 0.0
    %233 = vmatpush2.msra.mxu0 0.0
    %234 = vmatprep.subr.mxu0 0.0
    %235 = vmatpush2.msra.mxu0 0.0
    %236 = vmatprep.subr.mxu0 0.0
    %237 = vmatpush2.msra.mxu0 0.0
    %238 = vmatprep.mubr.f32.mxu0 0.0
    %239 = vmatmul.mubr.f32.gmra.mxu0 %v169
    %v240 = vpop.f32.mrf.mxu0
    %v241 = vadd.f32 %v173, %v240
    %v242 = vpop.f32.mrf.mxu0
    %243 = vdwg.mxu0
    %v244 = vmax.f32 %v241, 0.0
    %v245 = vlaneseq
    %v246 = vshrl.u32 %v245, 7
    %v247 = vsub.s32 0, %v246
    %v248 = vrot.slane %v90, %v247
    %249 = vmatprep.subr.mxu0 0.0
    %250 = vmatpush1.msra.mxu0 %v87
    %251 = vmatprep.subr.mxu0 0.0
    %252 = vmatpush1.msra.mxu0 %v86
    %253 = vmatprep.subr.mxu0 0.0
    %254 = vmatpush1.msra.mxu0 %v85
    %255 = vmatprep.subr.mxu0 0.0
    %256 = vmatpush1.msra.mxu0 %v84
    %257 = vmatprep.subr.mxu0 0.0
    %258 = vmatpush1.msra.mxu0 %v83
    %259 = vmatprep.subr.mxu0 0.0
    %260 = vmatpush1.msra.mxu0 %v82
    %261 = vmatprep.subr.mxu0 0.0
    %262 = vmatpush1.msra.mxu0 %v81
    %263 = vmatprep.subr.mxu0 0.0
    %264 = vmatpush1.msra.mxu0 %v80
    %265 = vmatprep.subr.mxu0 0.0
    %266 = vmatpush1.msra.mxu0 %v79
    %267 = vmatprep.subr.mxu0 0.0
    %268 = vmatpush1.msra.mxu0 %v78
    %269 = vmatprep.subr.mxu0 0.0
    %270 = vmatpush1.msra.mxu0 %v77
    %271 = vmatprep.subr.mxu0 0.0
    %272 = vmatpush1.msra.mxu0 %v76
    %273 = vmatprep.subr.mxu0 0.0
    %274 = vmatpush1.msra.mxu0 %v75
    %275 = vmatprep.subr.mxu0 0.0
    %276 = vmatpush1.msra.mxu0 %v74
    %277 = vmatprep.subr.mxu0 0.0
    %278 = vmatpush1.msra.mxu0 %v73
    %279 = vmatprep.subr.mxu0 0.0
    %280 = vmatpush1.msra.mxu0 %v72
    %281 = vmatprep.subr.mxu0 0.0
    %282 = vmatpush2.msra.mxu0 0.0
    %283 = vmatprep.subr.mxu0 0.0
    %284 = vmatpush2.msra.mxu0 0.0
    %285 = vmatprep.subr.mxu0 0.0
    %286 = vmatpush2.msra.mxu0 0.0
    %287 = vmatprep.subr.mxu0 0.0
    %288 = vmatpush2.msra.mxu0 0.0
    %289 = vmatprep.subr.mxu0 0.0
    %290 = vmatpush2.msra.mxu0 0.0
    %291 = vmatprep.subr.mxu0 0.0
    %292 = vmatpush2.msra.mxu0 0.0
    %293 = vmatprep.subr.mxu0 0.0
    %294 = vmatpush2.msra.mxu0 0.0
    %295 = vmatprep.subr.mxu0 0.0
    %296 = vmatpush2.msra.mxu0 0.0
    %297 = vmatprep.subr.mxu0 0.0
    %298 = vmatpush2.msra.mxu0 0.0
    %299 = vmatprep.subr.mxu0 0.0
    %300 = vmatpush2.msra.mxu0 0.0
    %301 = vmatprep.subr.mxu0 0.0
    %302 = vmatpush2.msra.mxu0 0.0
    %303 = vmatprep.subr.mxu0 0.0
    %304 = vmatpush2.msra.mxu0 0.0
    %305 = vmatprep.subr.mxu0 0.0
    %306 = vmatpush2.msra.mxu0 0.0
    %307 = vmatprep.subr.mxu0 0.0
    %308 = vmatpush2.msra.mxu0 0.0
    %309 = vmatprep.subr.mxu0 0.0
    %310 = vmatpush2.msra.mxu0 0.0
    %311 = vmatprep.subr.mxu0 0.0
    %312 = vmatpush2.msra.mxu0 0.0
    %313 = vmatprep.mubr.f32.mxu0 0.0
    %314 = vmatmul.mubr.f32.gmra.mxu0 %v244
    %v315 = vpop.f32.mrf.mxu0
    %v316 = vadd.f32 %v248, %v315
    %v317 = vpop.f32.mrf.mxu0
    %318 = vdwg.mxu0
    %319 = vst [vmem:[#allocation8] sm:$0xff] %v316
    // Predicated region
    $region26: #{tpu_custom_call.1} parent=1 // pred_check
      _
    $region27: #{tpu_custom_call.1} parent=1 // pred_check_branch
      %321 = sbr.rel (0) target = $region29
    $region28: #{tpu_custom_call.1} parent=1 // pred_region
      %s323 = ssub.s32 128, 128
      %324 = vsyncadd [#allocation4], %s323
      %s326 = sshll.u32 [#allocation8], 4
      %s327 = int_to_ptr.vmem [resolvable:$true] %s326
      %329 = dma.vmem_to_hbm [thread:$0]  %s327, 128, %s3, [#allocation4]
    $region29: #{tpu_custom_call.1} parent=1 // pred_fallthru
      _
    // Predicated region
    $region30: #{tpu_custom_call.1} parent=1 // pred_check
      _
    $region31: #{tpu_custom_call.1} parent=1 // pred_check_branch
      %331 = sbr.rel (0) target = $region33
    $region32: #{tpu_custom_call.1} parent=1 // pred_region
      %332 = dma.done [#allocation4], 128
    $region33: #{tpu_custom_call.1} parent=1 // pred_fallthru
      _
    %333 = vsyncpa [#allocation3], 1
    %334 = vsyncpa [#allocation6], 1
    %335 = vsyncpa [#allocation4], 1

</llo_original>
